<compile_context>
chip_gen: v5e
topology: v5e:2x2
jax: 0.10.0
libtpu: 0.0.40
codegen_flags: <defaults>
</compile_context>

<pallas_src>
import jax
import jax.numpy as jnp
import numpy as np
from jax.experimental import pallas as pl
from jax.experimental.pallas import tpu as pltpu

# Weight-buffer row layout (all multiples of 16 so bf16 (16,128) tiles stay aligned).
_M1_ROWS = 144            # conv1 pool-shift matrix : rows [0, 144),  cols [0, 512)
_M2_ROW0 = 144            # conv2 matrix            : rows [144,272), cols [0, 256)
_M2_ROWS = 128
_FC_ROW0 = 272            # fc1 matrix              : rows [272,528), cols [0, 128)
_FC_ROWS = 256
_W_ROWS = 528
_W_COLS = 512

# Per perf review: bf16 weight storage (native MXU path, half the weight DMA bytes).
# Set to jnp.float32 if bit-closer f32 parity is required.
MATMUL_DTYPE = jnp.bfloat16


# ----------------------------- fused Pallas kernel ----------------------------

def fused_forward_kernel(x_ref, w_ref, b_ref, o_ref):
    # x_ref: (TB, 144) f32   flattened 1x12x12 rows (index h*12 + w)
    # w_ref: (528, 512) bf16 packed GEMM matrices (conv1 | conv2 | fc1)
    # b_ref: (8, 512)  f32   packed biases (row 0: conv1, row 1: conv2, row 2: fc1)
    # o_ref: (TB, 128) f32   fc1 output, lanes [0, 2) valid, rest zero
    x = x_ref[...].astype(w_ref.dtype)

    # conv1 + ReLU + 2x2/2 maxpool: one 512-wide GEMM (the 4 pool shifts are
    # concatenated along N, each zero-padded to 128 lanes), then a 4-way max over
    # lane-aligned slices.  relu(max(.)) == max(relu(.)) and the conv bias is
    # shift-invariant, so bias+ReLU are applied once after the max.
    z = jnp.dot(x, w_ref[0:_M1_ROWS, :], preferred_element_type=jnp.float32)
    zmax = jnp.maximum(jnp.maximum(z[:, 0:128], z[:, 128:256]),
                       jnp.maximum(z[:, 256:384], z[:, 384:512]))
    pooled = jnp.maximum(zmax + b_ref[0:1, 0:128], 0.0)              # (TB,128) f32

    # conv2 + ReLU; output columns already in PyTorch flatten order oc*9 + oh*3 + ow,
    # K rows 54..127 are zero so the padded pooled lanes contribute nothing.
    h2 = jnp.dot(pooled.astype(w_ref.dtype),
                 w_ref[_M2_ROW0:_M2_ROW0 + _M2_ROWS, 0:256],
                 preferred_element_type=jnp.float32) + b_ref[1:2, 0:256]
    h2 = jnp.maximum(h2, 0.0)                                        # (TB,256) f32

    # fc1 + ReLU (K rows 144..255 and N cols 2..127 of the packed matrix are zero).
    out = jnp.dot(h2.astype(w_ref.dtype),
                  w_ref[_FC_ROW0:_FC_ROW0 + _FC_ROWS, 0:128],
                  preferred_element_type=jnp.float32) + b_ref[2:3, 0:128]
    o_ref[...] = jnp.maximum(out, 0.0)                               # (TB,128) f32


# ------------------------------ Pallas wrapper ---------------------------------

def _round_up(a, b):
    return (a + b - 1) // b * b


def two_layers_forward(x_nchw, packed):
    wmat, bias = packed
    B = x_nchw.shape[0]
    x_flat = x_nchw.reshape(B, 144)                 # metadata-only reshape
    tb = min(512, _round_up(B, 8))                  # batch rows per grid step
    out = pl.pallas_call(
        fused_forward_kernel,
        out_shape=jax.ShapeDtypeStruct((B, 128), jnp.float32),
        grid_spec=pltpu.PrefetchScalarGridSpec(
            num_scalar_prefetch=0,
            grid=(pl.cdiv(B, tb),),
            in_specs=[
                pl.BlockSpec((tb, 144), lambda i: (i, 0)),           # x: tiled batch
                pl.BlockSpec((_W_ROWS, _W_COLS), lambda i: (0, 0)),  # weights: resident
                pl.BlockSpec((8, _W_COLS), lambda i: (0, 0)),        # biases: resident
            ],
            out_specs=pl.BlockSpec((tb, 128), lambda i: (i, 0)),
        ),
        compiler_params=pltpu.CompilerParams(
            dimension_semantics=("parallel",)),
    )(x_flat, wmat, bias)
    return out[:, :2]                               # drop lane padding


# --------------------- one-time parameter packing (host side) -------------------

def prepare_params(w1, b1, w2, b2, wf, bf):
    """Pack all weights into one bf16 (528,512) matrix buffer + one f32 (8,512) bias
    buffer (done once, outside the per-forward path)."""
    w1 = np.asarray(w1, np.float32); b1 = np.asarray(b1, np.float32)
    w2 = np.asarray(w2, np.float32); b2 = np.asarray(b2, np.float32)
    wf = np.asarray(wf, np.float32); bf = np.asarray(bf, np.float32)

    wmat = np.zeros((_W_ROWS, _W_COLS), np.float32)

    # conv1 (1->6, k3, s2, p2) on 12x12 -> 7x7, composed with the four 2x2-pool
    # shifts (pool output 3x3; shifted conv positions stay inside the 7x7 map).
    # Shift d occupies lanes [128*d, 128*d + 54); column layout (ph*3 + pw)*6 + oc.
    for d, (di, dj) in enumerate(((0, 0), (0, 1), (1, 0), (1, 1))):
        base = 128 * d
        for ph in range(3):
            for pw in range(3):
                oh, ow = 2 * ph + di, 2 * pw + dj          # conv1 output position
                for ki in range(3):
                    for kj in range(3):
                        h, w = 2 * oh + ki - 2, 2 * ow + kj - 2   # input pixel (pad=2)
                        if 0 <= h < 12 and 0 <= w < 12:
                            for oc in range(6):
                                wmat[h * 12 + w, base + (ph * 3 + pw) * 6 + oc] += \
                                    w1[oc, 0, ki, kj]

    # conv2 (6->16, k3, s2, p2) on 3x3 -> 3x3; rows (ph*3+pw)*6 + ic (K padded to
    # 128 with zero rows), output columns oc*9 + oh*3 + ow == PyTorch flatten order.
    for oc in range(16):
        for oh in range(3):
            for ow in range(3):
                col = oc * 9 + oh * 3 + ow
                for ki in range(3):
                    for kj in range(3):
                        ph, pw = 2 * oh + ki - 2, 2 * ow + kj - 2
                        if 0 <= ph < 3 and 0 <= pw < 3:
                            for ic in range(6):
                                wmat[_M2_ROW0 + (ph * 3 + pw) * 6 + ic, col] += \
                                    w2[oc, ic, ki, kj]

    # fc1: (2,144) weight transposed into rows [272, 272+144), cols [0, 2).
    wmat[_FC_ROW0:_FC_ROW0 + 144, 0:2] = wf.T

    bias = np.zeros((8, _W_COLS), np.float32)
    bias[0, :54] = np.tile(b1, 9)          # conv1 bias, index pos*6 + oc
    bias[1, :144] = np.repeat(b2, 9)       # conv2 bias, index oc*9 + pos
    bias[2, :2] = bf                       # fc1 bias

    return (jnp.asarray(wmat).astype(MATMUL_DTYPE), jnp.asarray(bias))


# --------------------------------- reference ------------------------------------

def reference_forward(x, params):
    w1, b1, w2, b2, wf, bf = params
    hp = jax.lax.Precision.HIGHEST
    y = jax.lax.conv_general_dilated(x, w1, (2, 2), ((2, 2), (2, 2)),
                                     dimension_numbers=("NCHW", "OIHW", "NCHW"),
                                     precision=hp)
    y = jax.nn.relu(y + b1[None, :, None, None])
    y = jax.lax.reduce_window(y, -jnp.inf, jax.lax.max,
                              (1, 1, 2, 2), (1, 1, 2, 2), "VALID")
    y = jax.lax.conv_general_dilated(y, w2, (2, 2), ((2, 2), (2, 2)),
                                     dimension_numbers=("NCHW", "OIHW", "NCHW"),
                                     precision=hp)
    y = jax.nn.relu(y + b2[None, :, None, None])
    y = y.reshape(y.shape[0], -1)
    return jax.nn.relu(jnp.dot(y, wf.T, precision=hp) + bf[None, :])


# ----------------------------------- main ----------------------------------------

if __name__ == "__main__":
    key = jax.random.PRNGKey(0)
    kx, k1, k2, k3, k4, k5, k6 = jax.random.split(key, 7)
    B = 2
    # Input 12x12 so the flattened conv2 output is 16*3*3 = 144 (fc1 in_features).
    x = jax.random.normal(kx, (B, 1, 12, 12), dtype=jnp.float32)

    def uniform(k, shape, fan_in):
        bound = 1.0 / float(np.sqrt(fan_in))
        return jax.random.uniform(k, shape, jnp.float32, -bound, bound)

    raw_params = (
        uniform(k1, (6, 1, 3, 3), 9),   uniform(k2, (6,), 9),      # conv1
        uniform(k3, (16, 6, 3, 3), 54), uniform(k4, (16,), 54),    # conv2
        uniform(k5, (2, 144), 144),     uniform(k6, (2,), 144),    # fc1
    )

    packed = prepare_params(*raw_params)          # one-time weight packing
    fwd = jax.jit(two_layers_forward)

    out = jax.block_until_ready(fwd(x, packed))
    ref = jax.block_until_ready(reference_forward(x, raw_params))
    assert out.shape == (B, 2)
    # Tolerance sized for bf16 weight storage (perf-review item): bf16 has ~2^-9
    # relative precision; set MATMUL_DTYPE = jnp.float32 for ~1e-3 agreement.
    if MATMUL_DTYPE == jnp.bfloat16:
        atol, rtol = 5e-3, 1e-2
    else:
        atol, rtol = 1e-3, 1e-3
    np.testing.assert_allclose(np.asarray(out), np.asarray(ref), atol=atol, rtol=rtol)
    print("KERNEL_OK")
</pallas_src>

<mosaic_0001>
module attributes {stable_mosaic.version = 11 : i64} {
  func.func @fused_forward_kernel(%arg0: i32, %arg1: memref<8x144xf32, #tpu.memory_space<vmem>>, %arg2: memref<528x512xbf16, #tpu.memory_space<vmem>>, %arg3: memref<8x512xf32, #tpu.memory_space<vmem>>, %arg4: memref<8x128xf32, #tpu.memory_space<vmem>>) attributes {dimension_semantics = [#tpu.dimension_semantics<parallel>], iteration_bounds = array<i64: 1>, scalar_prefetch = 0 : i64, scratch_operands = 0 : i64, tpu.core_type = #tpu.core_type<tc>, window_params = [{transform_indices = @transform_0, window_bounds = array<i64: 8, 144>}, {pipeline_mode = #tpu.pipeline_mode<synchronous>, transform_indices = @transform_1, window_bounds = array<i64: 528, 512>}, {pipeline_mode = #tpu.pipeline_mode<synchronous>, transform_indices = @transform_2, window_bounds = array<i64: 8, 512>}, {transform_indices = @transform_3, window_bounds = array<i64: 8, 128>}]} {
    %c0 = arith.constant 0 : index
    %c0_0 = arith.constant 0 : index
    %0 = vector.load %arg1[%c0, %c0_0] : memref<8x144xf32, #tpu.memory_space<vmem>>, vector<8x144xf32>
    %1 = arith.truncf %0 : vector<8x144xf32> to vector<8x144xbf16>
    %c0_1 = arith.constant 0 : index
    %c0_2 = arith.constant 0 : index
    %2 = vector.load %arg2[%c0_1, %c0_2] : memref<528x512xbf16, #tpu.memory_space<vmem>>, vector<144x512xbf16>
    %cst = arith.constant dense<0.000000e+00> : vector<8x512xf32>
    %3 = tpu.matmul %1, %2, %cst {dimension_numbers = #tpu.dot_dimension_numbers<[1], [0], [0], [1], [0, 0, 1, 1], [], []>} : vector<8x144xbf16>, vector<144x512xbf16>, vector<8x512xf32> -> vector<8x512xf32>
    %4 = vector.extract_strided_slice %3 {offsets = [0, 0], sizes = [8, 128], strides = [1, 1]} : vector<8x512xf32> to vector<8x128xf32>
    %5 = vector.extract_strided_slice %3 {offsets = [0, 128], sizes = [8, 128], strides = [1, 1]} : vector<8x512xf32> to vector<8x128xf32>
    %6 = arith.maximumf %4, %5 : vector<8x128xf32>
    %7 = vector.extract_strided_slice %3 {offsets = [0, 256], sizes = [8, 128], strides = [1, 1]} : vector<8x512xf32> to vector<8x128xf32>
    %8 = vector.extract_strided_slice %3 {offsets = [0, 384], sizes = [8, 128], strides = [1, 1]} : vector<8x512xf32> to vector<8x128xf32>
    %9 = arith.maximumf %7, %8 : vector<8x128xf32>
    %10 = arith.maximumf %6, %9 : vector<8x128xf32>
    %c0_3 = arith.constant 0 : index
    %c0_4 = arith.constant 0 : index
    %11 = vector.load %arg3[%c0_3, %c0_4] : memref<8x512xf32, #tpu.memory_space<vmem>>, vector<1x128xf32>
    %12 = vector.broadcast %11 : vector<1x128xf32> to vector<8x128xf32>
    %13 = arith.addf %10, %12 : vector<8x128xf32>
    %cst_5 = arith.constant 0.000000e+00 : f32
    %14 = vector.broadcast %cst_5 : f32 to vector<8x128xf32>
    %15 = arith.maximumf %13, %14 : vector<8x128xf32>
    %16 = arith.truncf %15 : vector<8x128xf32> to vector<8x128xbf16>
    %c144 = arith.constant 144 : index
    %c0_6 = arith.constant 0 : index
    %17 = vector.load %arg2[%c144, %c0_6] : memref<528x512xbf16, #tpu.memory_space<vmem>>, vector<128x256xbf16>
    %cst_7 = arith.constant dense<0.000000e+00> : vector<8x256xf32>
    %18 = tpu.matmul %16, %17, %cst_7 {dimension_numbers = #tpu.dot_dimension_numbers<[1], [0], [0], [1], [0, 0, 1, 1], [], []>} : vector<8x128xbf16>, vector<128x256xbf16>, vector<8x256xf32> -> vector<8x256xf32>
    %c1 = arith.constant 1 : index
    %c0_8 = arith.constant 0 : index
    %19 = vector.load %arg3[%c1, %c0_8] : memref<8x512xf32, #tpu.memory_space<vmem>>, vector<1x256xf32>
    %20 = vector.broadcast %19 : vector<1x256xf32> to vector<8x256xf32>
    %21 = arith.addf %18, %20 : vector<8x256xf32>
    %cst_9 = arith.constant 0.000000e+00 : f32
    %22 = vector.broadcast %cst_9 : f32 to vector<8x256xf32>
    %23 = arith.maximumf %21, %22 : vector<8x256xf32>
    %24 = arith.truncf %23 : vector<8x256xf32> to vector<8x256xbf16>
    %c272 = arith.constant 272 : index
    %c0_10 = arith.constant 0 : index
    %25 = vector.load %arg2[%c272, %c0_10] : memref<528x512xbf16, #tpu.memory_space<vmem>>, vector<256x128xbf16>
    %cst_11 = arith.constant dense<0.000000e+00> : vector<8x128xf32>
    %26 = tpu.matmul %24, %25, %cst_11 {dimension_numbers = #tpu.dot_dimension_numbers<[1], [0], [0], [1], [0, 0, 1, 1], [], []>} : vector<8x256xbf16>, vector<256x128xbf16>, vector<8x128xf32> -> vector<8x128xf32>
    %c2 = arith.constant 2 : index
    %c0_12 = arith.constant 0 : index
    %27 = vector.load %arg3[%c2, %c0_12] : memref<8x512xf32, #tpu.memory_space<vmem>>, vector<1x128xf32>
    %28 = vector.broadcast %27 : vector<1x128xf32> to vector<8x128xf32>
    %29 = arith.addf %26, %28 : vector<8x128xf32>
    %cst_13 = arith.constant 0.000000e+00 : f32
    %30 = vector.broadcast %cst_13 : f32 to vector<8x128xf32>
    %31 = arith.maximumf %29, %30 : vector<8x128xf32>
    %c0_14 = arith.constant 0 : index
    %c0_15 = arith.constant 0 : index
    %32 = vector.load %arg4[%c0_14, %c0_15] : memref<8x128xf32, #tpu.memory_space<vmem>>, vector<8x128xf32>
    tpu.vector_store %arg4[%c0_14, %c0_15], %31 {strides = array<i32>} : memref<8x128xf32, #tpu.memory_space<vmem>>, vector<8x128xf32>,
    return
  }
  func.func @transform_0(%arg0: i32) -> (i32, i32) {
    %c0_i32 = arith.constant 0 : i32
    %c0_i32_0 = arith.constant 0 : i32
    return %arg0, %c0_i32 : i32, i32
  }
  func.func @transform_1(%arg0: i32) -> (i32, i32) {
    %c0_i32 = arith.constant 0 : i32
    %c0_i32_0 = arith.constant 0 : i32
    %c0_i32_1 = arith.constant 0 : i32
    return %c0_i32, %c0_i32_0 : i32, i32
  }
  func.func @transform_2(%arg0: i32) -> (i32, i32) {
    %c0_i32 = arith.constant 0 : i32
    %c0_i32_0 = arith.constant 0 : i32
    %c0_i32_1 = arith.constant 0 : i32
    return %c0_i32, %c0_i32_0 : i32, i32
  }
  func.func @transform_3(%arg0: i32) -> (i32, i32) {
    %c0_i32 = arith.constant 0 : i32
    %c0_i32_0 = arith.constant 0 : i32
    return %arg0, %c0_i32 : i32, i32
  }
}

</mosaic_0001>

<llo_original>
// kernel: two_layers_forward.1
$region0: #{two_layers_forward.1}
  #allocation0 [shape = 'u32[]', space=smem, size = 0x4, offset = 0x4, fixed_abs, tag = 'smem constant byte address 0x4 - core index']
  #allocation1 [shape = 'u32[72,128]{1,0:T(1,128)}', space=vmem, size = 0x9000, scoped, tag = 'internal scratch']
  %s0 = inlined_call_operand.vmem [shape: f32[2,144], index: 0, kind: input, shape index: {}]
  %s1 = inlined_call_operand.hbm [shape: bf16[528,512], index: 1, kind: input, shape index: {}]
  %s2 = inlined_call_operand.vmem [shape: f32[8,512], index: 2, kind: input, shape index: {}]
  %s3 = inlined_call_operand.hbm [shape: f32[2,128], index: 3, kind: output, shape index: {}]
  %s4 = sld [smem:[#allocation0]]
  $region26: #{two_layers_forward.1} parent=0
    _
  %s6 = ssub.s32 1, %s4
  %s7 = scalar_select 0, %s6, %s4
  $region1: #{two_layers_forward.1} parent=0
    #allocation2 [shape = 'u8[540672]{0}', space=vmem, size = 0x84000, scoped, tag = 'input window, operand 1, single buffered']
    #allocation3 [shape = 's32[1]{0}', space=sflag, size = 0x4, scoped, tag = 'scoped memory for two_layers_forward.1']
    #allocation4 [shape = 's32[1]{0}', space=sflag, size = 0x4, scoped, tag = 'scoped memory for two_layers_forward.1']
    #allocation5 [shape = 'u8[4096]{0}', space=vmem, size = 0x1000, scoped, tag = 'output window, operand 0, single buffered']
    %8 = vsyncpa [#allocation3], 0
    %9 = vsyncpa [#allocation4], 0
    // Predicated region
    $region2: #{two_layers_forward.1} parent=1 // pred_check
      _
    $region3: #{two_layers_forward.1} parent=1 // pred_check_branch
      %11 = sbr.rel (0) target = $region5
    $region4: #{two_layers_forward.1} parent=1 // pred_region
      _
    $region5: #{two_layers_forward.1} parent=1 // pred_fallthru
      _
    // Predicated region
    $region6: #{two_layers_forward.1} parent=1 // pred_check
      _
    $region7: #{two_layers_forward.1} parent=1 // pred_check_branch
      %13 = sbr.rel (0) target = $region9
    $region8: #{two_layers_forward.1} parent=1 // pred_region
      %15 = vsyncadd [#allocation3], 0
      %s16 = sshll.u32 %s1, 4
      %s17 = int_to_ptr.hbm [resolvable:$true] %s16
      %s18 = sshll.u32 [#allocation2], 4
      %s19 = int_to_ptr.vmem [resolvable:$true] %s18
      %24 = dma.hbm_to_vmem [thread:$0]  %s17, 16896, %s19, [#allocation3], 256, 256, 16
    $region9: #{two_layers_forward.1} parent=1 // pred_fallthru
      _
    // Predicated region
    $region10: #{two_layers_forward.1} parent=1 // pred_check
      _
    $region11: #{two_layers_forward.1} parent=1 // pred_check_branch
      %26 = sbr.rel (0) target = $region13
    $region12: #{two_layers_forward.1} parent=1 // pred_region
      _
    $region13: #{two_layers_forward.1} parent=1 // pred_fallthru
      _
    // Predicated region
    $region14: #{two_layers_forward.1} parent=1 // pred_check
      _
    $region15: #{two_layers_forward.1} parent=1 // pred_check_branch
      %28 = sbr.rel (0) target = $region17
    $region16: #{two_layers_forward.1} parent=1 // pred_region
      %30 = dma.done [#allocation3], 16896
    $region17: #{two_layers_forward.1} parent=1 // pred_fallthru
      _
    %v32 = vld [vmem:[%s0] sm:$0xf]
    %v33 = vld [vmem:[%s0 + $0x4] sm:$0xf]
    %v34 = vld [vmem:[%s0 + $0x8] sm:$0xf]
    %v35 = vld [vmem:[%s0 + $0xc] sm:$0xf]
    %40 = vst [vmem:[#allocation1] ss:$4 sm:$0xff] %v32
    %s41 = scalar_lea.vmem [#allocation1], 1
    %42 = vst [vmem:[%s41] ss:$4 sm:$0xff] %v33
    %s43 = scalar_lea.vmem [#allocation1], 2
    %44 = vst [vmem:[%s43] ss:$4 sm:$0xff] %v34
    %s45 = scalar_lea.vmem [#allocation1], 3
    %46 = vst [vmem:[%s45] ss:$4 sm:$0xff] %v35
    %v47 = vld.sshfl [vmem:[#allocation1] sm:$0xff pattern:$0x73625140]
    %v48 = vld.sshfl [vmem:[#allocation1 + $0x8] sm:$0xff pattern:$0x73625140]
    %v51 = vpack.c.bf16 %v47, %v47
    %v52 = vpack.c.bf16 %v48, %v48
    %v53 = vld [vmem:[#allocation2] sm:$0xff]
    %v54 = vld [vmem:[#allocation2 + $0x8] sm:$0xff]
    %v55 = vld [vmem:[#allocation2 + $0x10] sm:$0xff]
    %v56 = vld [vmem:[#allocation2 + $0x18] sm:$0xff]
    %v57 = vld [vmem:[#allocation2 + $0x20] sm:$0xff]
    %v58 = vld [vmem:[#allocation2 + $0x28] sm:$0xff]
    %v59 = vld [vmem:[#allocation2 + $0x30] sm:$0xff]
    %v60 = vld [vmem:[#allocation2 + $0x38] sm:$0xff]
    %v61 = vld [vmem:[#allocation2 + $0x40] sm:$0xff]
    %v62 = vld [vmem:[#allocation2 + $0x48] sm:$0xff]
    %v63 = vld [vmem:[#allocation2 + $0x50] sm:$0xff]
    %v64 = vld [vmem:[#allocation2 + $0x58] sm:$0xff]
    %v65 = vld [vmem:[#allocation2 + $0x60] sm:$0xff]
    %v66 = vld [vmem:[#allocation2 + $0x68] sm:$0xff]
    %v67 = vld [vmem:[#allocation2 + $0x70] sm:$0xff]
    %v68 = vld [vmem:[#allocation2 + $0x78] sm:$0xff]
    %v69 = vld [vmem:[#allocation2 + $0x80] sm:$0xff]
    %v70 = vld [vmem:[#allocation2 + $0x88] sm:$0xff]
    %v71 = vld [vmem:[#allocation2 + $0x90] sm:$0xff]
    %v72 = vld [vmem:[#allocation2 + $0x98] sm:$0xff]
    %v73 = vld [vmem:[#allocation2 + $0xa0] sm:$0xff]
    %v74 = vld [vmem:[#allocation2 + $0xa8] sm:$0xff]
    %v75 = vld [vmem:[#allocation2 + $0xb0] sm:$0xff]
    %v76 = vld [vmem:[#allocation2 + $0xb8] sm:$0xff]
    %v77 = vld [vmem:[#allocation2 + $0xc0] sm:$0xff]
    %v78 = vld [vmem:[#allocation2 + $0xc8] sm:$0xff]
    %v79 = vld [vmem:[#allocation2 + $0xd0] sm:$0xff]
    %v80 = vld [vmem:[#allocation2 + $0xd8] sm:$0xff]
    %v81 = vld [vmem:[#allocation2 + $0xe0] sm:$0xff]
    %v82 = vld [vmem:[#allocation2 + $0xe8] sm:$0xff]
    %v83 = vld [vmem:[#allocation2 + $0xf0] sm:$0xff]
    %v84 = vld [vmem:[#allocation2 + $0xf8] sm:$0xff]
    %v85 = vld [vmem:[#allocation2 + $0x100] sm:$0xff]
    %v86 = vld [vmem:[#allocation2 + $0x108] sm:$0xff]
    %v87 = vld [vmem:[#allocation2 + $0x110] sm:$0xff]
    %v88 = vld [vmem:[#allocation2 + $0x118] sm:$0xff]
    %v125 = vunpack.c.l.b16 %v53
    %v126 = vunpack.c.h.b16 %v53
    %v127 = vunpack.c.l.b16 %v54
    %v128 = vunpack.c.h.b16 %v54
    %v129 = vunpack.c.l.b16 %v55
    %v130 = vunpack.c.h.b16 %v55
    %v131 = vunpack.c.l.b16 %v56
    %v132 = vunpack.c.h.b16 %v56
    %v133 = vunpack.c.l.b16 %v57
    %v134 = vunpack.c.h.b16 %v57
    %v135 = vunpack.c.l.b16 %v58
    %v136 = vunpack.c.h.b16 %v58
    %v137 = vunpack.c.l.b16 %v59
    %v138 = vunpack.c.h.b16 %v59
    %v139 = vunpack.c.l.b16 %v60
    %v140 = vunpack.c.h.b16 %v60
    %v141 = vunpack.c.l.b16 %v61
    %v142 = vunpack.c.h.b16 %v61
    %v143 = vunpack.c.l.b16 %v62
    %v144 = vunpack.c.h.b16 %v62
    %v145 = vunpack.c.l.b16 %v63
    %v146 = vunpack.c.h.b16 %v63
    %v147 = vunpack.c.l.b16 %v64
    %v148 = vunpack.c.h.b16 %v64
    %v149 = vunpack.c.l.b16 %v65
    %v150 = vunpack.c.h.b16 %v65
    %v151 = vunpack.c.l.b16 %v66
    %v152 = vunpack.c.h.b16 %v66
    %v153 = vunpack.c.l.b16 %v67
    %v154 = vunpack.c.h.b16 %v67
    %v155 = vunpack.c.l.b16 %v68
    %v156 = vunpack.c.h.b16 %v68
    %v157 = vunpack.c.l.b16 %v69
    %v158 = vunpack.c.h.b16 %v69
    %v159 = vunpack.c.l.b16 %v70
    %v160 = vunpack.c.h.b16 %v70
    %v161 = vunpack.c.l.b16 %v71
    %v162 = vunpack.c.h.b16 %v71
    %v163 = vunpack.c.l.b16 %v72
    %v164 = vunpack.c.h.b16 %v72
    %v165 = vunpack.c.l.b16 %v73
    %v166 = vunpack.c.h.b16 %v73
    %v167 = vunpack.c.l.b16 %v74
    %v168 = vunpack.c.h.b16 %v74
    %v169 = vunpack.c.l.b16 %v75
    %v170 = vunpack.c.h.b16 %v75
    %v171 = vunpack.c.l.b16 %v76
    %v172 = vunpack.c.h.b16 %v76
    %v173 = vunpack.c.l.b16 %v77
    %v174 = vunpack.c.h.b16 %v77
    %v175 = vunpack.c.l.b16 %v78
    %v176 = vunpack.c.h.b16 %v78
    %v177 = vunpack.c.l.b16 %v79
    %v178 = vunpack.c.h.b16 %v79
    %v179 = vunpack.c.l.b16 %v80
    %v180 = vunpack.c.h.b16 %v80
    %v181 = vunpack.c.l.b16 %v81
    %v182 = vunpack.c.h.b16 %v81
    %v183 = vunpack.c.l.b16 %v82
    %v184 = vunpack.c.h.b16 %v82
    %v185 = vunpack.c.l.b16 %v83
    %v186 = vunpack.c.h.b16 %v83
    %v187 = vunpack.c.l.b16 %v84
    %v188 = vunpack.c.h.b16 %v84
    %v189 = vunpack.c.l.b16 %v85
    %v190 = vunpack.c.h.b16 %v85
    %v191 = vunpack.c.l.b16 %v86
    %v192 = vunpack.c.h.b16 %v86
    %v193 = vunpack.c.l.b16 %v87
    %v194 = vunpack.c.h.b16 %v87
    %v195 = vunpack.c.l.b16 %v88
    %v196 = vunpack.c.h.b16 %v88
    %v197 = vpack.c.b16 %v129, %v125
    %v198 = vpack.c.b16 %v130, %v126
    %v199 = vpack.c.b16 %v131, %v127
    %v200 = vpack.c.b16 %v132, %v128
    %v201 = vpack.c.b16 %v137, %v133
    %v202 = vpack.c.b16 %v138, %v134
    %v203 = vpack.c.b16 %v139, %v135
    %v204 = vpack.c.b16 %v140, %v136
    %v205 = vpack.c.b16 %v145, %v141
    %v206 = vpack.c.b16 %v146, %v142
    %v207 = vpack.c.b16 %v147, %v143
    %v208 = vpack.c.b16 %v148, %v144
    %v209 = vpack.c.b16 %v153, %v149
    %v210 = vpack.c.b16 %v154, %v150
    %v211 = vpack.c.b16 %v155, %v151
    %v212 = vpack.c.b16 %v156, %v152
    %v213 = vpack.c.b16 %v161, %v157
    %v214 = vpack.c.b16 %v162, %v158
    %v215 = vpack.c.b16 %v163, %v159
    %v216 = vpack.c.b16 %v164, %v160
    %v217 = vpack.c.b16 %v169, %v165
    %v218 = vpack.c.b16 %v170, %v166
    %v219 = vpack.c.b16 %v171, %v167
    %v220 = vpack.c.b16 %v172, %v168
    %v221 = vpack.c.b16 %v177, %v173
    %v222 = vpack.c.b16 %v178, %v174
    %v223 = vpack.c.b16 %v179, %v175
    %v224 = vpack.c.b16 %v180, %v176
    %v225 = vpack.c.b16 %v185, %v181
    %v226 = vpack.c.b16 %v186, %v182
    %v227 = vpack.c.b16 %v187, %v183
    %v228 = vpack.c.b16 %v188, %v184
    %v229 = vpack.c.b16 %v193, %v189
    %v230 = vpack.c.b16 %v194, %v190
    %v231 = vpack.c.b16 %v195, %v191
    %v232 = vpack.c.b16 %v196, %v192
    %vm269 = vcmask 130048
    %v271 = vsel %vm269, %v52, 0
    %273 = vmatpush.bf16.msra.mxu0 %v225
    %274 = vmatpush.bf16.msra.mxu0 %v221
    %275 = vmatpush.bf16.msra.mxu0 %v217
    %276 = vmatpush.bf16.msra.mxu0 %v213
    %277 = vmatpush.bf16.msra.mxu0 %v209
    %278 = vmatpush.bf16.msra.mxu0 %v205
    %279 = vmatpush.bf16.msra.mxu0 %v201
    %280 = vmatpush.bf16.msra.mxu0 %v197
    %281 = vmatmul.bf16.gmra.mxu0 %v51
    %v282 = vpop.f32.mrf.mxu0
    %v283 = vadd.f32 0.0, %v282
    %v284 = vpop.f32.mrf.mxu0
    %285 = vdwg.mxu0
    %286 = vmatpush.bf16.msra.mxu0 0
    %287 = vmatpush.bf16.msra.mxu0 0
    %288 = vmatpush.bf16.msra.mxu0 0
    %289 = vmatpush.bf16.msra.mxu0 0
    %290 = vmatpush.bf16.msra.mxu0 0
    %291 = vmatpush.bf16.msra.mxu0 0
    %292 = vmatpush.bf16.msra.mxu0 0
    %293 = vmatpush.bf16.msra.mxu0 %v229
    %294 = vmatmul.bf16.gmra.mxu0 %v271
    %v295 = vpop.f32.mrf.mxu0
    %v296 = vadd.f32 %v283, %v295
    %v297 = vpop.f32.mrf.mxu0
    %298 = vdwg.mxu0
    %299 = vmatpush.bf16.msra.mxu0 %v226
    %300 = vmatpush.bf16.msra.mxu0 %v222
    %301 = vmatpush.bf16.msra.mxu0 %v218
    %302 = vmatpush.bf16.msra.mxu0 %v214
    %303 = vmatpush.bf16.msra.mxu0 %v210
    %304 = vmatpush.bf16.msra.mxu0 %v206
    %305 = vmatpush.bf16.msra.mxu0 %v202
    %306 = vmatpush.bf16.msra.mxu0 %v198
    %307 = vmatmul.bf16.gmra.mxu0 %v51
    %v308 = vpop.f32.mrf.mxu0
    %v309 = vadd.f32 0.0, %v308
    %v310 = vpop.f32.mrf.mxu0
    %311 = vdwg.mxu0
    %312 = vmatpush.bf16.msra.mxu0 0
    %313 = vmatpush.bf16.msra.mxu0 0
    %314 = vmatpush.bf16.msra.mxu0 0
    %315 = vmatpush.bf16.msra.mxu0 0
    %316 = vmatpush.bf16.msra.mxu0 0
    %317 = vmatpush.bf16.msra.mxu0 0
    %318 = vmatpush.bf16.msra.mxu0 0
    %319 = vmatpush.bf16.msra.mxu0 %v230
    %320 = vmatmul.bf16.gmra.mxu0 %v271
    %v321 = vpop.f32.mrf.mxu0
    %v322 = vadd.f32 %v309, %v321
    %v323 = vpop.f32.mrf.mxu0
    %324 = vdwg.mxu0
    %325 = vmatpush.bf16.msra.mxu0 %v227
    %326 = vmatpush.bf16.msra.mxu0 %v223
    %327 = vmatpush.bf16.msra.mxu0 %v219
    %328 = vmatpush.bf16.msra.mxu0 %v215
    %329 = vmatpush.bf16.msra.mxu0 %v211
    %330 = vmatpush.bf16.msra.mxu0 %v207
    %331 = vmatpush.bf16.msra.mxu0 %v203
    %332 = vmatpush.bf16.msra.mxu0 %v199
    %333 = vmatmul.bf16.gmra.mxu0 %v51
    %v334 = vpop.f32.mrf.mxu0
    %v335 = vadd.f32 0.0, %v334
    %v336 = vpop.f32.mrf.mxu0
    %337 = vdwg.mxu0
    %338 = vmatpush.bf16.msra.mxu0 0
    %339 = vmatpush.bf16.msra.mxu0 0
    %340 = vmatpush.bf16.msra.mxu0 0
    %341 = vmatpush.bf16.msra.mxu0 0
    %342 = vmatpush.bf16.msra.mxu0 0
    %343 = vmatpush.bf16.msra.mxu0 0
    %344 = vmatpush.bf16.msra.mxu0 0
    %345 = vmatpush.bf16.msra.mxu0 %v231
    %346 = vmatmul.bf16.gmra.mxu0 %v271
    %v347 = vpop.f32.mrf.mxu0
    %v348 = vadd.f32 %v335, %v347
    %v349 = vpop.f32.mrf.mxu0
    %350 = vdwg.mxu0
    %351 = vmatpush.bf16.msra.mxu0 %v228
    %352 = vmatpush.bf16.msra.mxu0 %v224
    %353 = vmatpush.bf16.msra.mxu0 %v220
    %354 = vmatpush.bf16.msra.mxu0 %v216
    %355 = vmatpush.bf16.msra.mxu0 %v212
    %356 = vmatpush.bf16.msra.mxu0 %v208
    %357 = vmatpush.bf16.msra.mxu0 %v204
    %358 = vmatpush.bf16.msra.mxu0 %v200
    %359 = vmatmul.bf16.gmra.mxu0 %v51
    %v360 = vpop.f32.mrf.mxu0
    %v361 = vadd.f32 0.0, %v360
    %v362 = vpop.f32.mrf.mxu0
    %363 = vdwg.mxu0
    %364 = vmatpush.bf16.msra.mxu0 0
    %365 = vmatpush.bf16.msra.mxu0 0
    %366 = vmatpush.bf16.msra.mxu0 0
    %367 = vmatpush.bf16.msra.mxu0 0
    %368 = vmatpush.bf16.msra.mxu0 0
    %369 = vmatpush.bf16.msra.mxu0 0
    %370 = vmatpush.bf16.msra.mxu0 0
    %371 = vmatpush.bf16.msra.mxu0 %v232
    %372 = vmatmul.bf16.gmra.mxu0 %v271
    %v373 = vpop.f32.mrf.mxu0
    %v374 = vadd.f32 %v361, %v373
    %v375 = vpop.f32.mrf.mxu0
    %376 = vdwg.mxu0
    %v377 = vmax.f32 %v296, %v322
    %v378 = vmax.f32 %v348, %v374
    %v379 = vmax.f32 %v377, %v378
    %v380 = vld [vmem:[%s2] ss:$0 sm:$0xff]
    %v381 = vadd.f32 %v379, %v380
    %v382 = vmax.f32 %v381, 0.0
    %v383 = vpack.c.bf16 %v382, %v382
    %v384 = vld [vmem:[#allocation2 + $0x120] sm:$0xff]
    %v385 = vld [vmem:[#allocation2 + $0x130] sm:$0xff]
    %v386 = vld [vmem:[#allocation2 + $0x140] sm:$0xff]
    %v387 = vld [vmem:[#allocation2 + $0x150] sm:$0xff]
    %v388 = vld [vmem:[#allocation2 + $0x160] sm:$0xff]
    %v389 = vld [vmem:[#allocation2 + $0x170] sm:$0xff]
    %v390 = vld [vmem:[#allocation2 + $0x180] sm:$0xff]
    %v391 = vld [vmem:[#allocation2 + $0x190] sm:$0xff]
    %v392 = vld [vmem:[#allocation2 + $0x1a0] sm:$0xff]
    %v393 = vld [vmem:[#allocation2 + $0x1b0] sm:$0xff]
    %v394 = vld [vmem:[#allocation2 + $0x1c0] sm:$0xff]
    %v395 = vld [vmem:[#allocation2 + $0x1d0] sm:$0xff]
    %v396 = vld [vmem:[#allocation2 + $0x1e0] sm:$0xff]
    %v397 = vld [vmem:[#allocation2 + $0x1f0] sm:$0xff]
    %v398 = vld [vmem:[#allocation2 + $0x200] sm:$0xff]
    %v399 = vld [vmem:[#allocation2 + $0x210] sm:$0xff]
    %s400 = scalar_lea.vmem %s2, 1
    %v401 = vld [vmem:[%s400] ss:$8 sm:$0x3]
    %v403 = vperm.slane %v401, 0
    %v404 = vperm.slane %v401, 1
    %v423 = vunpack.c.l.b16 %v384
    %v424 = vunpack.c.h.b16 %v384
    %v425 = vunpack.c.l.b16 %v385
    %v426 = vunpack.c.h.b16 %v385
    %v427 = vunpack.c.l.b16 %v386
    %v428 = vunpack.c.h.b16 %v386
    %v429 = vunpack.c.l.b16 %v387
    %v430 = vunpack.c.h.b16 %v387
    %v431 = vunpack.c.l.b16 %v388
    %v432 = vunpack.c.h.b16 %v388
    %v433 = vunpack.c.l.b16 %v389
    %v434 = vunpack.c.h.b16 %v389
    %v435 = vunpack.c.l.b16 %v390
    %v436 = vunpack.c.h.b16 %v390
    %v437 = vunpack.c.l.b16 %v391
    %v438 = vunpack.c.h.b16 %v391
    %v439 = vunpack.c.l.b16 %v392
    %v440 = vunpack.c.h.b16 %v392
    %v441 = vunpack.c.l.b16 %v393
    %v442 = vunpack.c.h.b16 %v393
    %v443 = vunpack.c.l.b16 %v394
    %v444 = vunpack.c.h.b16 %v394
    %v445 = vunpack.c.l.b16 %v395
    %v446 = vunpack.c.h.b16 %v395
    %v447 = vunpack.c.l.b16 %v396
    %v448 = vunpack.c.h.b16 %v396
    %v449 = vunpack.c.l.b16 %v397
    %v450 = vunpack.c.h.b16 %v397
    %v451 = vunpack.c.l.b16 %v398
    %v452 = vunpack.c.h.b16 %v398
    %v453 = vunpack.c.l.b16 %v399
    %v454 = vunpack.c.h.b16 %v399
    %v455 = vpack.c.b16 %v425, %v423
    %v456 = vpack.c.b16 %v426, %v424
    %v457 = vpack.c.b16 %v429, %v427
    %v458 = vpack.c.b16 %v430, %v428
    %v459 = vpack.c.b16 %v433, %v431
    %v460 = vpack.c.b16 %v434, %v432
    %v461 = vpack.c.b16 %v437, %v435
    %v462 = vpack.c.b16 %v438, %v436
    %v463 = vpack.c.b16 %v441, %v439
    %v464 = vpack.c.b16 %v442, %v440
    %v465 = vpack.c.b16 %v445, %v443
    %v466 = vpack.c.b16 %v446, %v444
    %v467 = vpack.c.b16 %v449, %v447
    %v468 = vpack.c.b16 %v450, %v448
    %v469 = vpack.c.b16 %v453, %v451
    %v470 = vpack.c.b16 %v454, %v452
    %487 = vmatpush.bf16.msra.mxu0 %v469
    %488 = vmatpush.bf16.msra.mxu0 %v467
    %489 = vmatpush.bf16.msra.mxu0 %v465
    %490 = vmatpush.bf16.msra.mxu0 %v463
    %491 = vmatpush.bf16.msra.mxu0 %v461
    %492 = vmatpush.bf16.msra.mxu0 %v459
    %493 = vmatpush.bf16.msra.mxu0 %v457
    %494 = vmatpush.bf16.msra.mxu0 %v455
    %495 = vmatmul.bf16.gmra.mxu0 %v383
    %v496 = vpop.f32.mrf.mxu0
    %v497 = vadd.f32 %v403, %v496
    %v498 = vpop.f32.mrf.mxu0
    %499 = vdwg.mxu0
    %500 = vmatpush.bf16.msra.mxu0 %v470
    %501 = vmatpush.bf16.msra.mxu0 %v468
    %502 = vmatpush.bf16.msra.mxu0 %v466
    %503 = vmatpush.bf16.msra.mxu0 %v464
    %504 = vmatpush.bf16.msra.mxu0 %v462
    %505 = vmatpush.bf16.msra.mxu0 %v460
    %506 = vmatpush.bf16.msra.mxu0 %v458
    %507 = vmatpush.bf16.msra.mxu0 %v456
    %508 = vmatmul.bf16.gmra.mxu0 %v383
    %v509 = vpop.f32.mrf.mxu0
    %v510 = vadd.f32 %v404, %v509
    %v511 = vpop.f32.mrf.mxu0
    %512 = vdwg.mxu0
    %v513 = vmax.f32 %v497, 0.0
    %v514 = vmax.f32 %v510, 0.0
    %v515 = vpack.c.bf16 %v513, %v513
    %v516 = vpack.c.bf16 %v514, %v514
    %v517 = vld [vmem:[#allocation2 + $0x220] sm:$0xf]
    %v518 = vld [vmem:[#allocation2 + $0x230] sm:$0xf]
    %v519 = vld [vmem:[#allocation2 + $0x240] sm:$0xf]
    %v520 = vld [vmem:[#allocation2 + $0x250] sm:$0xf]
    %v521 = vld [vmem:[#allocation2 + $0x260] sm:$0xf]
    %v522 = vld [vmem:[#allocation2 + $0x270] sm:$0xf]
    %v523 = vld [vmem:[#allocation2 + $0x280] sm:$0xf]
    %v524 = vld [vmem:[#allocation2 + $0x290] sm:$0xf]
    %v525 = vld [vmem:[#allocation2 + $0x2a0] sm:$0xf]
    %v526 = vld [vmem:[#allocation2 + $0x2b0] sm:$0xf]
    %v527 = vld [vmem:[#allocation2 + $0x2c0] sm:$0xf]
    %v528 = vld [vmem:[#allocation2 + $0x2d0] sm:$0xf]
    %v529 = vld [vmem:[#allocation2 + $0x2e0] sm:$0xf]
    %v530 = vld [vmem:[#allocation2 + $0x2f0] sm:$0xf]
    %v531 = vld [vmem:[#allocation2 + $0x300] sm:$0xf]
    %v532 = vld [vmem:[#allocation2 + $0x310] sm:$0xf]
    %v533 = vld [vmem:[#allocation2 + $0x320] sm:$0xf]
    %v534 = vld [vmem:[#allocation2 + $0x330] sm:$0xf]
    %v535 = vld [vmem:[#allocation2 + $0x340] sm:$0xf]
    %v536 = vld [vmem:[#allocation2 + $0x350] sm:$0xf]
    %v537 = vld [vmem:[#allocation2 + $0x360] sm:$0xf]
    %v538 = vld [vmem:[#allocation2 + $0x370] sm:$0xf]
    %v539 = vld [vmem:[#allocation2 + $0x380] sm:$0xf]
    %v540 = vld [vmem:[#allocation2 + $0x390] sm:$0xf]
    %v541 = vld [vmem:[#allocation2 + $0x3a0] sm:$0xf]
    %v542 = vld [vmem:[#allocation2 + $0x3b0] sm:$0xf]
    %v543 = vld [vmem:[#allocation2 + $0x3c0] sm:$0xf]
    %v544 = vld [vmem:[#allocation2 + $0x3d0] sm:$0xf]
    %v545 = vld [vmem:[#allocation2 + $0x3e0] sm:$0xf]
    %v546 = vld [vmem:[#allocation2 + $0x3f0] sm:$0xf]
    %v547 = vld [vmem:[#allocation2 + $0x400] sm:$0xf]
    %v548 = vld [vmem:[#allocation2 + $0x410] sm:$0xf]
    %v549 = vld [vmem:[%s2 + $0x2] ss:$0 sm:$0xff]
    %v582 = vunpack.c.l.b16 %v517
    %v583 = vunpack.c.l.b16 %v518
    %v584 = vunpack.c.l.b16 %v519
    %v585 = vunpack.c.l.b16 %v520
    %v586 = vunpack.c.l.b16 %v521
    %v587 = vunpack.c.l.b16 %v522
    %v588 = vunpack.c.l.b16 %v523
    %v589 = vunpack.c.l.b16 %v524
    %v590 = vunpack.c.l.b16 %v525
    %v591 = vunpack.c.l.b16 %v526
    %v592 = vunpack.c.l.b16 %v527
    %v593 = vunpack.c.l.b16 %v528
    %v594 = vunpack.c.l.b16 %v529
    %v595 = vunpack.c.l.b16 %v530
    %v596 = vunpack.c.l.b16 %v531
    %v597 = vunpack.c.l.b16 %v532
    %v598 = vunpack.c.l.b16 %v533
    %v599 = vunpack.c.l.b16 %v534
    %v600 = vunpack.c.l.b16 %v535
    %v601 = vunpack.c.l.b16 %v536
    %v602 = vunpack.c.l.b16 %v537
    %v603 = vunpack.c.l.b16 %v538
    %v604 = vunpack.c.l.b16 %v539
    %v605 = vunpack.c.l.b16 %v540
    %v606 = vunpack.c.l.b16 %v541
    %v607 = vunpack.c.l.b16 %v542
    %v608 = vunpack.c.l.b16 %v543
    %v609 = vunpack.c.l.b16 %v544
    %v610 = vunpack.c.l.b16 %v545
    %v611 = vunpack.c.l.b16 %v546
    %v612 = vunpack.c.l.b16 %v547
    %v613 = vunpack.c.l.b16 %v548
    %v614 = vpack.c.b16 %v583, %v582
    %v615 = vpack.c.b16 %v585, %v584
    %v616 = vpack.c.b16 %v587, %v586
    %v617 = vpack.c.b16 %v589, %v588
    %v618 = vpack.c.b16 %v591, %v590
    %v619 = vpack.c.b16 %v593, %v592
    %v620 = vpack.c.b16 %v595, %v594
    %v621 = vpack.c.b16 %v597, %v596
    %v622 = vpack.c.b16 %v599, %v598
    %v623 = vpack.c.b16 %v601, %v600
    %v624 = vpack.c.b16 %v603, %v602
    %v625 = vpack.c.b16 %v605, %v604
    %v626 = vpack.c.b16 %v607, %v606
    %v627 = vpack.c.b16 %v609, %v608
    %v628 = vpack.c.b16 %v611, %v610
    %v629 = vpack.c.b16 %v613, %v612
    %646 = vmatpush.bf16.msra.mxu0 %v621
    %647 = vmatpush.bf16.msra.mxu0 %v620
    %648 = vmatpush.bf16.msra.mxu0 %v619
    %649 = vmatpush.bf16.msra.mxu0 %v618
    %650 = vmatpush.bf16.msra.mxu0 %v617
    %651 = vmatpush.bf16.msra.mxu0 %v616
    %652 = vmatpush.bf16.msra.mxu0 %v615
    %653 = vmatpush.bf16.msra.mxu0 %v614
    %654 = vmatmul.bf16.gmra.mxu0 %v515
    %v655 = vpop.f32.mrf.mxu0
    %v656 = vadd.f32 %v549, %v655
    %v657 = vpop.f32.mrf.mxu0
    %658 = vdwg.mxu0
    %659 = vmatpush.bf16.msra.mxu0 %v629
    %660 = vmatpush.bf16.msra.mxu0 %v628
    %661 = vmatpush.bf16.msra.mxu0 %v627
    %662 = vmatpush.bf16.msra.mxu0 %v626
    %663 = vmatpush.bf16.msra.mxu0 %v625
    %664 = vmatpush.bf16.msra.mxu0 %v624
    %665 = vmatpush.bf16.msra.mxu0 %v623
    %666 = vmatpush.bf16.msra.mxu0 %v622
    %667 = vmatmul.bf16.gmra.mxu0 %v516
    %v668 = vpop.f32.mrf.mxu0
    %v669 = vadd.f32 %v656, %v668
    %v670 = vpop.f32.mrf.mxu0
    %671 = vdwg.mxu0
    %v672 = vmax.f32 %v669, 0.0
    %673 = vst [vmem:[#allocation5] sm:$0xff] %v672
    // Predicated region
    $region18: #{two_layers_forward.1} parent=1 // pred_check
      _
    $region19: #{two_layers_forward.1} parent=1 // pred_check_branch
      %675 = sbr.rel (0) target = $region21
    $region20: #{two_layers_forward.1} parent=1 // pred_region
      %677 = vsyncadd [#allocation4], 96
      %s678 = sshll.u32 [#allocation5], 4
      %s679 = int_to_ptr.vmem [resolvable:$true] %s678
      %s680 = sshll.u32 %s3, 4
      %s681 = int_to_ptr.hbm [resolvable:$true] %s680
      %686 = dma.vmem_to_hbm [thread:$0]  %s679, 32, %s681, [#allocation4], 32, 32, 2
    $region21: #{two_layers_forward.1} parent=1 // pred_fallthru
      _
    // Predicated region
    $region22: #{two_layers_forward.1} parent=1 // pred_check
      _
    $region23: #{two_layers_forward.1} parent=1 // pred_check_branch
      %688 = sbr.rel (0) target = $region25
    $region24: #{two_layers_forward.1} parent=1 // pred_region
      %690 = dma.done [#allocation4], 128
    $region25: #{two_layers_forward.1} parent=1 // pred_fallthru
      _
    %691 = vsyncpa [#allocation3], 1
    %692 = vsyncpa [#allocation4], 1

</llo_original>
